<compile_context>
chip_gen: v5e
topology: v5e:2x2
jax: 0.10.0
libtpu: 0.0.40
codegen_flags: <defaults>
</compile_context>

<pallas_src>
import functools

import jax
import jax.numpy as jnp
from jax.experimental import pallas as pl
from jax.experimental.pallas import tpu as pltpu


def _cgm_kernel(x_ref, w_ref, b2_ref, o_ref):
    """x_ref: (A, tb, tw) planar activations; w_ref: (A, T, tw) weights;
       b2_ref: (T, tw) squared bias; o_ref: (tb, tw) output tile."""
    arity = x_ref.shape[0]
    terms = b2_ref.shape[0]

    xs = [x_ref[k] for k in range(arity)]                 # each (tb, tw)
    w = w_ref[...]                                        # (A, T, tw), tiny
    b2 = b2_ref[...]                                      # (T, tw), tiny

    # Hoisted (1, tw) parameter rows; Mosaic keeps these in a
    # sublane-replicated layout, so each xs[k] * row is one full-tile vmul
    # (no materialized (tb, tw) broadcast).
    w_rows = [[w[k, t:t + 1, :] for k in range(arity)] for t in range(terms)]
    b2_rows = [b2[t:t + 1, :] for t in range(terms)]

    # relu(max_t y_t) == max(0, y_0, ..., y_{T-1}): fold the ReLU into the
    # running max by starting it at 0.
    m = None
    for t in range(terms):                                # unrolled (tiny T)
        prods = [xs[k] * w_rows[t][k] for k in range(arity)]
        while len(prods) > 1:                             # balanced add tree
            nxt = [prods[i] + prods[i + 1]
                   for i in range(0, len(prods) - 1, 2)]
            if len(prods) % 2:
                nxt.append(prods[-1])
            prods = nxt
        y = prods[0] + b2_rows[t]
        m = jnp.maximum(y, 0.0) if m is None else jnp.maximum(m, y)

    o_ref[...] = m.astype(o_ref.dtype)


def _round_up(x, m):
    return ((x + m - 1) // m) * m


def _vmem_capacity_bytes():
    try:
        cap = getattr(pltpu.get_tpu_info(), "vmem_capacity_bytes", None)
        if cap:
            return int(cap)
    except Exception:
        pass
    return 64 * 1024 * 1024          # v7x-safe fallback


def _block_bytes(tb, tw, arity, terms):
    # Double-buffered f32 bytes: X block + output block + parameter blocks.
    return 2 * 4 * ((arity + 1) * tb * tw + (arity + 1) * terms * tw)


def _pick_tile_w(wd_pad, tile_w):
    if wd_pad <= tile_w:
        return wd_pad
    best = 128                        # wd_pad is always a 128 multiple
    d = 256
    while d <= tile_w:
        if wd_pad % d == 0:
            best = d
        d += 128
    return best


def _pick_tile_b(B, tile_b, arity, terms, tw, n_w, vmem_budget, min_steps=8):
    tb = min(max(8, (tile_b // 8) * 8), _round_up(B, 8))
    # Cap against the double-buffered VMEM budget.
    while tb > 8 and _block_bytes(tb, tw, arity, terms) > vmem_budget:
        tb = max(8, ((tb // 2) // 8) * 8)
    # Enough grid steps to feed both v7x TensorCores / reach pipeline steady
    # state (no effect on single-TC v5e/v6e beyond negligible step overhead).
    while tb > 8 and pl.cdiv(B, tb) * n_w < min_steps:
        new_tb = max(8, ((tb // 2) // 8) * 8)
        if new_tb == tb:
            break
        tb = new_tb
    return tb


@functools.partial(jax.jit, static_argnames=("arity", "tile_b", "tile_w"))
def clamped_generalized_maxout(X, weights_pos_neg, bias, *, arity,
                               tile_b=1024, tile_w=512):
    """X: (B, arity*output_width) f32; weights_pos_neg: (2*arity, terms, Wd);
       bias: (Wd, terms).  Returns relu(max_t(X1 . W + bias^2)) of (B, Wd)."""
    B, N = X.shape
    output_width, terms = bias.shape
    assert N == arity * output_width
    assert weights_pos_neg.shape == (2 * arity, terms, output_width)

    # Lane-dense width: pad Wd up to a 128 multiple in the tiny parameter
    # arrays and the output; slice the output back at the end.
    wd_pad = _round_up(max(output_width, 128), 128)
    pad_w = wd_pad - output_width

    # Tiny parameter preprocessing (negligible traffic).
    w = weights_pos_neg[:arity] - weights_pos_neg[arity:]       # (A, T, Wd)
    b2 = jnp.transpose(bias * bias)                             # (T, Wd)
    if pad_w:
        w = jnp.pad(w, ((0, 0), (0, 0), (0, pad_w)))
        b2 = jnp.pad(b2, ((0, 0), (0, pad_w)))

    # Planar activation layout (A, B, Wd): lane dim = output_width.
    # TODO(synk): keep activations planar upstream to drop this extra HBM pass.
    x_planar = jnp.transpose(X.reshape(B, output_width, arity), (2, 0, 1))
    if pad_w:
        x_planar = jnp.pad(x_planar, ((0, 0), (0, 0), (0, pad_w)))

    tw = _pick_tile_w(wd_pad, tile_w)
    n_w = wd_pad // tw

    vmem_cap = _vmem_capacity_bytes()
    tb = _pick_tile_b(B, tile_b, arity, terms, tw, n_w,
                      vmem_budget=vmem_cap // 3)
    n_b = pl.cdiv(B, tb)

    needed = _block_bytes(tb, tw, arity, terms)
    vmem_limit = int(min(max(2 * needed, 16 * 1024 * 1024), vmem_cap // 2))

    # Width outermost / batch innermost: the weight & bias block index is
    # constant across the inner batch loop, so those blocks are not re-fetched.
    out = pl.pallas_call(
        _cgm_kernel,
        out_shape=jax.ShapeDtypeStruct((B, wd_pad), X.dtype),
        grid_spec=pltpu.PrefetchScalarGridSpec(
            num_scalar_prefetch=0,
            grid=(n_w, n_b),
            in_specs=[
                pl.BlockSpec((arity, tb, tw), lambda j, i: (0, i, j)),   # X
                pl.BlockSpec((arity, terms, tw), lambda j, i: (0, 0, j)),  # W
                pl.BlockSpec((terms, tw), lambda j, i: (0, j)),          # bias^2
            ],
            out_specs=pl.BlockSpec((tb, tw), lambda j, i: (i, j)),
        ),
        compiler_params=pltpu.CompilerParams(
            dimension_semantics=("parallel", "parallel"),
            vmem_limit_bytes=vmem_limit,
        ),
    )(x_planar, w, b2)

    if pad_w:
        out = out[:, :output_width]
    return out


def _reference(X, weights_pos_neg, bias, arity):
    B = X.shape[0]
    output_width, terms = bias.shape
    X1 = X.reshape(B, output_width, arity)
    weights = weights_pos_neg[:arity] - weights_pos_neg[arity:]   # (A, T, Wd)
    Y1 = jnp.einsum('ijk,klj->ijl', X1, weights)                  # (B, Wd, T)
    Y2 = Y1 + (bias * bias)[None, :, :]
    return jnp.maximum(jnp.max(Y2, axis=2), 0.0)


def _make_inputs(key, batch, arity, terms, output_width):
    k_x, k_w, k_b = jax.random.split(key, 3)
    # Simplex-style raw param init (forward uses the raw parameter values;
    # the simplex projection itself is a training-time parameter update).
    p = jax.random.uniform(k_w, (2 * arity, terms, output_width),
                           dtype=jnp.float32)
    p = jnp.log(p + 1e-15)
    p = p / jnp.sum(p, axis=0, keepdims=True)
    bias = 0.1 * jax.random.normal(k_b, (output_width, terms),
                                   dtype=jnp.float32)
    X = jax.random.normal(k_x, (batch, arity * output_width),
                          dtype=jnp.float32)
    return X, p, bias


if __name__ == "__main__":
    key = jax.random.PRNGKey(0)

    # Primary module-like config plus a ragged-batch / non-128-width config to
    # exercise the cdiv edge blocks and the lane-padding path.
    configs = [
        dict(batch=16, arity=2, terms=4, output_width=128),
        dict(batch=13, arity=3, terms=2, output_width=192),
    ]
    for idx, cfg in enumerate(configs):
        key, sub = jax.random.split(key)
        X, p, bias = _make_inputs(sub, cfg["batch"], cfg["arity"],
                                  cfg["terms"], cfg["output_width"])
        out = clamped_generalized_maxout(X, p, bias, arity=cfg["arity"])
        out = jax.block_until_ready(out)
        ref = _reference(X, p, bias, cfg["arity"])
        assert out.shape == (cfg["batch"], cfg["output_width"]), out.shape
        assert jnp.allclose(out, ref, atol=1e-5, rtol=1e-5), \
            f"mismatch in config {idx}"

    print("KERNEL_OK")
</pallas_src>

<mosaic_0001>
module attributes {stable_mosaic.version = 11 : i64} {
  func.func @_cgm_kernel(%arg0: i32, %arg1: i32, %arg2: memref<2x8x128xf32, #tpu.memory_space<vmem>>, %arg3: memref<2x4x128xf32, #tpu.memory_space<vmem>>, %arg4: memref<4x128xf32, #tpu.memory_space<vmem>>, %arg5: memref<8x128xf32, #tpu.memory_space<vmem>>) attributes {dimension_semantics = [#tpu.dimension_semantics<parallel>, #tpu.dimension_semantics<parallel>], iteration_bounds = array<i64: 1, 2>, scalar_prefetch = 0 : i64, scratch_operands = 0 : i64, tpu.core_type = #tpu.core_type<tc>, window_params = [{transform_indices = @transform_0, window_bounds = array<i64: 2, 8, 128>}, {transform_indices = @transform_1, window_bounds = array<i64: 2, 4, 128>}, {transform_indices = @transform_2, window_bounds = array<i64: 4, 128>}, {transform_indices = @transform_3, window_bounds = array<i64: 8, 128>}]} {
    %c0 = arith.constant 0 : index
    %c0_0 = arith.constant 0 : index
    %c0_1 = arith.constant 0 : index
    %0 = vector.load %arg2[%c0, %c0_0, %c0_1] : memref<2x8x128xf32, #tpu.memory_space<vmem>>, vector<1x8x128xf32>
    %1 = vector.shape_cast %0 : vector<1x8x128xf32> to vector<8x128xf32>
    %c1 = arith.constant 1 : index
    %c0_2 = arith.constant 0 : index
    %c0_3 = arith.constant 0 : index
    %2 = vector.load %arg2[%c1, %c0_2, %c0_3] : memref<2x8x128xf32, #tpu.memory_space<vmem>>, vector<1x8x128xf32>
    %3 = vector.shape_cast %2 : vector<1x8x128xf32> to vector<8x128xf32>
    %c0_4 = arith.constant 0 : index
    %c0_5 = arith.constant 0 : index
    %c0_6 = arith.constant 0 : index
    %4 = vector.load %arg3[%c0_4, %c0_5, %c0_6] : memref<2x4x128xf32, #tpu.memory_space<vmem>>, vector<2x4x128xf32>
    %c0_7 = arith.constant 0 : index
    %c0_8 = arith.constant 0 : index
    %5 = vector.load %arg4[%c0_7, %c0_8] : memref<4x128xf32, #tpu.memory_space<vmem>>, vector<4x128xf32>
    %6 = vector.extract_strided_slice %4 {offsets = [0, 0, 0], sizes = [1, 1, 128], strides = [1, 1, 1]} : vector<2x4x128xf32> to vector<1x1x128xf32>
    %7 = vector.shape_cast %6 : vector<1x1x128xf32> to vector<1x128xf32>
    %8 = vector.extract_strided_slice %4 {offsets = [1, 0, 0], sizes = [1, 1, 128], strides = [1, 1, 1]} : vector<2x4x128xf32> to vector<1x1x128xf32>
    %9 = vector.shape_cast %8 : vector<1x1x128xf32> to vector<1x128xf32>
    %10 = vector.extract_strided_slice %4 {offsets = [0, 1, 0], sizes = [1, 1, 128], strides = [1, 1, 1]} : vector<2x4x128xf32> to vector<1x1x128xf32>
    %11 = vector.shape_cast %10 : vector<1x1x128xf32> to vector<1x128xf32>
    %12 = vector.extract_strided_slice %4 {offsets = [1, 1, 0], sizes = [1, 1, 128], strides = [1, 1, 1]} : vector<2x4x128xf32> to vector<1x1x128xf32>
    %13 = vector.shape_cast %12 : vector<1x1x128xf32> to vector<1x128xf32>
    %14 = vector.extract_strided_slice %4 {offsets = [0, 2, 0], sizes = [1, 1, 128], strides = [1, 1, 1]} : vector<2x4x128xf32> to vector<1x1x128xf32>
    %15 = vector.shape_cast %14 : vector<1x1x128xf32> to vector<1x128xf32>
    %16 = vector.extract_strided_slice %4 {offsets = [1, 2, 0], sizes = [1, 1, 128], strides = [1, 1, 1]} : vector<2x4x128xf32> to vector<1x1x128xf32>
    %17 = vector.shape_cast %16 : vector<1x1x128xf32> to vector<1x128xf32>
    %18 = vector.extract_strided_slice %4 {offsets = [0, 3, 0], sizes = [1, 1, 128], strides = [1, 1, 1]} : vector<2x4x128xf32> to vector<1x1x128xf32>
    %19 = vector.shape_cast %18 : vector<1x1x128xf32> to vector<1x128xf32>
    %20 = vector.extract_strided_slice %4 {offsets = [1, 3, 0], sizes = [1, 1, 128], strides = [1, 1, 1]} : vector<2x4x128xf32> to vector<1x1x128xf32>
    %21 = vector.shape_cast %20 : vector<1x1x128xf32> to vector<1x128xf32>
    %22 = vector.extract_strided_slice %5 {offsets = [0, 0], sizes = [1, 128], strides = [1, 1]} : vector<4x128xf32> to vector<1x128xf32>
    %23 = vector.extract_strided_slice %5 {offsets = [1, 0], sizes = [1, 128], strides = [1, 1]} : vector<4x128xf32> to vector<1x128xf32>
    %24 = vector.extract_strided_slice %5 {offsets = [2, 0], sizes = [1, 128], strides = [1, 1]} : vector<4x128xf32> to vector<1x128xf32>
    %25 = vector.extract_strided_slice %5 {offsets = [3, 0], sizes = [1, 128], strides = [1, 1]} : vector<4x128xf32> to vector<1x128xf32>
    %26 = vector.broadcast %7 : vector<1x128xf32> to vector<8x128xf32>
    %27 = arith.mulf %1, %26 : vector<8x128xf32>
    %28 = vector.broadcast %9 : vector<1x128xf32> to vector<8x128xf32>
    %29 = arith.mulf %3, %28 : vector<8x128xf32>
    %30 = arith.addf %27, %29 : vector<8x128xf32>
    %31 = vector.broadcast %22 : vector<1x128xf32> to vector<8x128xf32>
    %32 = arith.addf %30, %31 : vector<8x128xf32>
    %cst = arith.constant 0.000000e+00 : f32
    %33 = vector.broadcast %cst : f32 to vector<8x128xf32>
    %34 = arith.maximumf %32, %33 : vector<8x128xf32>
    %35 = vector.broadcast %11 : vector<1x128xf32> to vector<8x128xf32>
    %36 = arith.mulf %1, %35 : vector<8x128xf32>
    %37 = vector.broadcast %13 : vector<1x128xf32> to vector<8x128xf32>
    %38 = arith.mulf %3, %37 : vector<8x128xf32>
    %39 = arith.addf %36, %38 : vector<8x128xf32>
    %40 = vector.broadcast %23 : vector<1x128xf32> to vector<8x128xf32>
    %41 = arith.addf %39, %40 : vector<8x128xf32>
    %42 = arith.maximumf %34, %41 : vector<8x128xf32>
    %43 = vector.broadcast %15 : vector<1x128xf32> to vector<8x128xf32>
    %44 = arith.mulf %1, %43 : vector<8x128xf32>
    %45 = vector.broadcast %17 : vector<1x128xf32> to vector<8x128xf32>
    %46 = arith.mulf %3, %45 : vector<8x128xf32>
    %47 = arith.addf %44, %46 : vector<8x128xf32>
    %48 = vector.broadcast %24 : vector<1x128xf32> to vector<8x128xf32>
    %49 = arith.addf %47, %48 : vector<8x128xf32>
    %50 = arith.maximumf %42, %49 : vector<8x128xf32>
    %51 = vector.broadcast %19 : vector<1x128xf32> to vector<8x128xf32>
    %52 = arith.mulf %1, %51 : vector<8x128xf32>
    %53 = vector.broadcast %21 : vector<1x128xf32> to vector<8x128xf32>
    %54 = arith.mulf %3, %53 : vector<8x128xf32>
    %55 = arith.addf %52, %54 : vector<8x128xf32>
    %56 = vector.broadcast %25 : vector<1x128xf32> to vector<8x128xf32>
    %57 = arith.addf %55, %56 : vector<8x128xf32>
    %58 = arith.maximumf %50, %57 : vector<8x128xf32>
    %c0_9 = arith.constant 0 : index
    %c0_10 = arith.constant 0 : index
    %59 = vector.load %arg5[%c0_9, %c0_10] : memref<8x128xf32, #tpu.memory_space<vmem>>, vector<8x128xf32>
    tpu.vector_store %arg5[%c0_9, %c0_10], %58 {strides = array<i32>} : memref<8x128xf32, #tpu.memory_space<vmem>>, vector<8x128xf32>,
    return
  }
  func.func @transform_0(%arg0: i32, %arg1: i32) -> (i32, i32, i32) {
    %c0_i32 = arith.constant 0 : i32
    %c0_i32_0 = arith.constant 0 : i32
    return %c0_i32, %arg1, %arg0 : i32, i32, i32
  }
  func.func @transform_1(%arg0: i32, %arg1: i32) -> (i32, i32, i32) {
    %c0_i32 = arith.constant 0 : i32
    %c0_i32_0 = arith.constant 0 : i32
    %c0_i32_1 = arith.constant 0 : i32
    return %c0_i32, %c0_i32_0, %arg0 : i32, i32, i32
  }
  func.func @transform_2(%arg0: i32, %arg1: i32) -> (i32, i32) {
    %c0_i32 = arith.constant 0 : i32
    %c0_i32_0 = arith.constant 0 : i32
    return %c0_i32, %arg0 : i32, i32
  }
  func.func @transform_3(%arg0: i32, %arg1: i32) -> (i32, i32) {
    %c0_i32 = arith.constant 0 : i32
    return %arg1, %arg0 : i32, i32
  }
}

</mosaic_0001>

<llo_original>
// kernel: clamped_generalized_maxout.1
$region0: #{clamped_generalized_maxout.1}
  #allocation0 [shape = 'u32[]', space=smem, size = 0x4, offset = 0x4, fixed_abs, tag = 'smem constant byte address 0x4 - core index']
  #allocation1 [shape = 'u32[72,128]{1,0:T(1,128)}', space=vmem, size = 0x9000, scoped, tag = 'internal scratch']
  %s0 = inlined_call_operand.vmem [shape: f32[2,16,128], index: 0, kind: input, shape index: {}]
  %s1 = inlined_call_operand.vmem [shape: f32[2,4,128], index: 1, kind: input, shape index: {}]
  %s2 = inlined_call_operand.vmem [shape: f32[4,128], index: 2, kind: input, shape index: {}]
  %s3 = inlined_call_operand.hbm [shape: f32[16,128], index: 3, kind: output, shape index: {}]
  %s4 = sld [smem:[#allocation0]]
  $region83: #{clamped_generalized_maxout.1} parent=0
    _
  %s6 = ssub.s32 1, %s4
  %s7 = scalar_select 0, %s6, %s4
  $region1: #{clamped_generalized_maxout.1} parent=0
    #allocation2 [shape = 'u8[16384]{0}', space=vmem, size = 0x4000, scoped, tag = 'input window, operand 0']
    #allocation3 [shape = 'u8[8192]{0}', space=vmem, size = 0x2000, scoped, tag = 'output window, operand 0']
    #allocation4 [shape = 's32[2]{0}', space=sflag, size = 0x8, scoped, tag = 'scoped memory for clamped_generalized_maxout.1']
    %8 = vsyncpa [#allocation4], 0
    %s9 = scalar_lea.sflag [#allocation4], 1
    %10 = vsyncpa %s9, 0
    loop: start=0, step=1, limit=4
    $region2: #{clamped_generalized_maxout.1} parent=1 // loop_pre_header
      _
    $region3: #{clamped_generalized_maxout.1} parent=1 // loop_header
      %s12 = sphi 0, %s16
      %p13 = scmp.ge.s32.totalorder %s12, 4
      %s19 = sphi 0, %s31
      %s20 = sphi 0, %s27
      %s21 = sphi 0, %s19
      %s22 = sphi 0, %s20
      %s23 = sphi 0, %s21
      %s24 = sphi 0, %s22
      %s36 = sphi 0, %s38
      %s39 = sphi 0, %s36
      %s40 = sphi 0, %s39
      %s56 = sphi 0, %s40
      %s62 = sphi 0, %s64
      %s65 = sphi 0, %s62
      %s66 = sphi 0, %s65
      %s82 = sphi 0, %s66
      %s88 = sphi 0, %s90
      %s91 = sphi 0, %s88
      %s92 = sphi 0, %s91
      %s108 = sphi 0, %s92
      %s116 = sphi 0, %s118
      %s119 = sphi 0, %s116
      %s120 = sphi 0, %s119
      %s136 = sphi 0, %s120
    $region4: #{clamped_generalized_maxout.1} parent=1 // loop_header_branch
      %15 = sbr.rel (%p13) target = $region8
    $region5: #{clamped_generalized_maxout.1} parent=1 // loop_body
      %s17 = ssub.s32 %s12, 1
      %s18 = ssub.s32 %s12, 2
      %s25 = sadd.s32 1, %s20
      %p26 = scmp.ge.s32.totalorder %s25, 2
      %s27 = scalar_select %p26, 0, %s25
      %s28 = sadd.s32 1, %s19
      %s29 = scalar_select %p26, %s28, %s19
      %p30 = scmp.ge.s32.totalorder %s29, 1
      %s31 = scalar_select %p30, 0, %s29
      %s32 = ssub.s32 %s20, %s27
      %s33 = ssub.s32 %s19, %s31
      %s34 = sor.u32 %s32, %s33
      %p35 = scmp.eq.s32.totalorder %s34, 0
      %s37 = sadd.s32 %s36, 1
      %s38 = scalar_select %p35, %s36, %s37
      %p41 = pneg %p35
      %p42 = scmp.eq.s32.totalorder %s12, 1
      %p43 = por %p41, %p42
      %p44 = scmp.ne.s32.totalorder %s36, %s39
      %p45 = scmp.eq.s32.totalorder %s12, 0
      %p46 = por %p44, %p45
      %p47 = scmp.ne.s32.totalorder %s36, %s39
      %p48 = scmp.eq.s32.totalorder %s17, 1
      %p49 = por %p47, %p48
      %p50 = scmp.ne.s32.totalorder %s39, %s40
      %p51 = scmp.eq.s32.totalorder %s17, 0
      %p52 = por %p50, %p51
      %p53 = scmp.ne.s32.totalorder %s39, %s40
      %p54 = scmp.eq.s32.totalorder %s18, 1
      %p55 = por %p53, %p54
      %p57 = scmp.ne.s32.totalorder %s40, %s56
      %p58 = scmp.eq.s32.totalorder %s18, 0
      %p59 = por %p57, %p58
      %s60 = ssub.s32 %s19, %s31
      %p61 = scmp.eq.s32.totalorder %s60, 0
      %s63 = sadd.s32 %s62, 1
      %s64 = scalar_select %p61, %s62, %s63
      %p67 = pneg %p61
      %p68 = scmp.eq.s32.totalorder %s12, 1
      %p69 = por %p67, %p68
      %p70 = scmp.ne.s32.totalorder %s62, %s65
      %p71 = scmp.eq.s32.totalorder %s12, 0
      %p72 = por %p70, %p71
      %p73 = scmp.ne.s32.totalorder %s62, %s65
      %p74 = scmp.eq.s32.totalorder %s17, 1
      %p75 = por %p73, %p74
      %p76 = scmp.ne.s32.totalorder %s65, %s66
      %p77 = scmp.eq.s32.totalorder %s17, 0
      %p78 = por %p76, %p77
      %p79 = scmp.ne.s32.totalorder %s65, %s66
      %p80 = scmp.eq.s32.totalorder %s18, 1
      %p81 = por %p79, %p80
      %p83 = scmp.ne.s32.totalorder %s66, %s82
      %p84 = scmp.eq.s32.totalorder %s18, 0
      %p85 = por %p83, %p84
      %s86 = ssub.s32 %s19, %s31
      %p87 = scmp.eq.s32.totalorder %s86, 0
      %s89 = sadd.s32 %s88, 1
      %s90 = scalar_select %p87, %s88, %s89
      %p93 = pneg %p87
      %p94 = scmp.eq.s32.totalorder %s12, 1
      %p95 = por %p93, %p94
      %p96 = scmp.ne.s32.totalorder %s88, %s91
      %p97 = scmp.eq.s32.totalorder %s12, 0
      %p98 = por %p96, %p97
      %p99 = scmp.ne.s32.totalorder %s88, %s91
      %p100 = scmp.eq.s32.totalorder %s17, 1
      %p101 = por %p99, %p100
      %p102 = scmp.ne.s32.totalorder %s91, %s92
      %p103 = scmp.eq.s32.totalorder %s17, 0
      %p104 = por %p102, %p103
      %p105 = scmp.ne.s32.totalorder %s91, %s92
      %p106 = scmp.eq.s32.totalorder %s18, 1
      %p107 = por %p105, %p106
      %p109 = scmp.ne.s32.totalorder %s92, %s108
      %p110 = scmp.eq.s32.totalorder %s18, 0
      %p111 = por %p109, %p110
      %s112 = ssub.s32 %s20, %s27
      %s113 = ssub.s32 %s19, %s31
      %s114 = sor.u32 %s112, %s113
      %p115 = scmp.eq.s32.totalorder %s114, 0
      %s117 = sadd.s32 %s116, 1
      %s118 = scalar_select %p115, %s116, %s117
      %p121 = pneg %p115
      %p122 = scmp.eq.s32.totalorder %s12, 1
      %p123 = por %p121, %p122
      %p124 = scmp.ne.s32.totalorder %s116, %s119
      %p125 = scmp.eq.s32.totalorder %s12, 0
      %p126 = por %p124, %p125
      %p127 = scmp.ne.s32.totalorder %s116, %s119
      %p128 = scmp.eq.s32.totalorder %s17, 1
      %p129 = por %p127, %p128
      %p130 = scmp.ne.s32.totalorder %s119, %s120
      %p131 = scmp.eq.s32.totalorder %s17, 0
      %p132 = por %p130, %p131
      %p133 = scmp.ne.s32.totalorder %s119, %s120
      %p134 = scmp.eq.s32.totalorder %s18, 1
      %p135 = por %p133, %p134
      %p137 = scmp.ne.s32.totalorder %s120, %s136
      %p138 = scmp.eq.s32.totalorder %s18, 0
      %p139 = por %p137, %p138
      %p140 = scmp.le.s32.totalorder 1, %s12
      %p141 = scmp.lt.s32.totalorder %s12, 3
      %p142 = pnand %p140, %p141
      %p143 = pneg %p142
      // Predicated region
      $region9: #{clamped_generalized_maxout.1} parent=5 // pred_check
        _
      $region10: #{clamped_generalized_maxout.1} parent=5 // pred_check_branch
        %145 = sbr.rel (%p142) target = $region12
      $region11: #{clamped_generalized_maxout.1} parent=5 // pred_region
        %s146 = ssub.s32 %s12, 1
        // Predicated region
        $region13: #{clamped_generalized_maxout.1} parent=11 // pred_check
          %p147 = pneg %p78
        $region14: #{clamped_generalized_maxout.1} parent=11 // pred_check_branch
          %149 = sbr.rel (%p147) target = $region16
        $region15: #{clamped_generalized_maxout.1} parent=11 // pred_region
          %p150 = scmp.lt.s32.totalorder %s21, 0
          %s151 = scalar_select %p150, %s21, 0
          %s152 = smul.addr %s151, 4
          %s153 = scalar_lea.vmem %s1, %s152
        $region16: #{clamped_generalized_maxout.1} parent=11 // pred_fallthru
          _
        // Predicated region
        $region17: #{clamped_generalized_maxout.1} parent=11 // pred_check
          %p154 = pneg %p104
        $region18: #{clamped_generalized_maxout.1} parent=11 // pred_check_branch
          %156 = sbr.rel (%p154) target = $region20
        $region19: #{clamped_generalized_maxout.1} parent=11 // pred_region
          %p157 = scmp.lt.s32.totalorder %s21, 0
          %s158 = scalar_select %p157, %s21, 0
          %s159 = smul.addr %s158, 4
          %s160 = scalar_lea.vmem %s2, %s159
        $region20: #{clamped_generalized_maxout.1} parent=11 // pred_fallthru
          _
      $region12: #{clamped_generalized_maxout.1} parent=5 // pred_fallthru
        _
      %p161 = scmp.lt.s32.totalorder %s12, 2
      // Predicated region
      $region21: #{clamped_generalized_maxout.1} parent=5 // pred_check
        %p162 = pneg %p161
      $region22: #{clamped_generalized_maxout.1} parent=5 // pred_check_branch
        %164 = sbr.rel (%p162) target = $region24
      $region23: #{clamped_generalized_maxout.1} parent=5 // pred_region
        // Predicated region
        $region25: #{clamped_generalized_maxout.1} parent=23 // pred_check
          %p165 = pneg %p46
        $region26: #{clamped_generalized_maxout.1} parent=23 // pred_check_branch
          %167 = sbr.rel (%p165) target = $region28
        $region27: #{clamped_generalized_maxout.1} parent=23 // pred_region
          %s168 = sand.u32 %s36, 1
          %s169 = sand.u32 %s36, 1
          %s170 = smul.addr %s169, 16
          %s171 = scalar_lea.vmem [#allocation2], %s170
          %s172 = sadd.s32 %s19, %s20
          %s173 = smul.addr %s172, 8
          %s174 = scalar_lea.vmem %s0, %s173
          // Predicated region
          $region29: #{clamped_generalized_maxout.1} parent=27 // pred_check
            _
          $region30: #{clamped_generalized_maxout.1} parent=27 // pred_check_branch
            %176 = sbr.rel (0) target = $region32
          $region31: #{clamped_generalized_maxout.1} parent=27 // pred_region
            // Predicated region
            $region33: #{clamped_generalized_maxout.1} parent=31 // pred_check
              _
            $region34: #{clamped_generalized_maxout.1} parent=31 // pred_check_branch
              %178 = sbr.rel (0) target = $region36
            $region35: #{clamped_generalized_maxout.1} parent=31 // pred_region
              // Predicated region
              $region48: #{clamped_generalized_maxout.1} parent=35 // pred_check
                _
              $region49: #{clamped_generalized_maxout.1} parent=35 // pred_check_branch
                %196 = sbr.rel (0) target = $region51
              $region50: #{clamped_generalized_maxout.1} parent=35 // pred_region
                loop: start=0, step=1, limit=1
                $region52: #{clamped_generalized_maxout.1} parent=50 // loop_pre_header
                  _
                $region53: #{clamped_generalized_maxout.1} parent=50 // loop_header
                  %s198 = sphi 0, %s202
                  %p199 = scmp.ge.s32.totalorder %s198, 1
                  %s203 = sphi %s174, %s174
                  %s204 = sphi %s171, %s171
                $region54: #{clamped_generalized_maxout.1} parent=50 // loop_header_branch
                  %201 = sbr.rel (%p199) target = $region58
                $region55: #{clamped_generalized_maxout.1} parent=50 // loop_body
                  %v205 = vld [vmem:[%s203] sm:$0xff]
                  %206 = vst [vmem:[%s204] sm:$0xff] %v205
                  %v207 = vld [vmem:[%s203 + $0x10] sm:$0xff]
                  %208 = vst [vmem:[%s204 + $0x8] sm:$0xff] %v207
                $region56: #{clamped_generalized_maxout.1} parent=50 // loop_footer
                  %s202 = sadd.s32 1, %s198
                $region57: #{clamped_generalized_maxout.1} parent=50 // loop_footer_branch
                  %197 = sbr.rel target = $region53
                $region58: #{clamped_generalized_maxout.1} parent=50 // loop_exit
                  _
              $region51: #{clamped_generalized_maxout.1} parent=35 // pred_fallthru
                _
              // Predicated region
              $region59: #{clamped_generalized_maxout.1} parent=35 // pred_check
                _
              $region60: #{clamped_generalized_maxout.1} parent=35 // pred_check_branch
                %210 = sbr.rel target = $region62
              $region61: #{clamped_generalized_maxout.1} parent=35 // pred_region
                _
              $region62: #{clamped_generalized_maxout.1} parent=35 // pred_fallthru
                _
            $region36: #{clamped_generalized_maxout.1} parent=31 // pred_fallthru
              _
            // Predicated region
            $region37: #{clamped_generalized_maxout.1} parent=31 // pred_check
              _
            $region38: #{clamped_generalized_maxout.1} parent=31 // pred_check_branch
              %180 = sbr.rel target = $region40
            $region39: #{clamped_generalized_maxout.1} parent=31 // pred_region
              %s182 = ssub.s32 256, 1
              loop: start=0, step=1, limit=1
              $region41: #{clamped_generalized_maxout.1} parent=39 // loop_pre_header
                _
              $region42: #{clamped_generalized_maxout.1} parent=39 // loop_header
                %s184 = sphi 0, %s188
                %p185 = scmp.ge.s32.totalorder %s184, 1
                %s189 = sphi %s174, %s174
                %s190 = sphi %s171, %s171
              $region43: #{clamped_generalized_maxout.1} parent=39 // loop_header_branch
                %187 = sbr.rel (%p185) target = $region47
              $region44: #{clamped_generalized_maxout.1} parent=39 // loop_body
                %v191 = vld [vmem:[%s189] sm:%s182]
                %192 = vst [vmem:[%s190] sm:%s182] %v191
                %v193 = vld [vmem:[%s189 + $0x10] sm:%s182]
                %194 = vst [vmem:[%s190 + $0x8] sm:%s182] %v193
              $region45: #{clamped_generalized_maxout.1} parent=39 // loop_footer
                %s188 = sadd.s32 1, %s184
              $region46: #{clamped_generalized_maxout.1} parent=39 // loop_footer_branch
                %183 = sbr.rel target = $region42
              $region47: #{clamped_generalized_maxout.1} parent=39 // loop_exit
                _
            $region40: #{clamped_generalized_maxout.1} parent=31 // pred_fallthru
              _
          $region32: #{clamped_generalized_maxout.1} parent=27 // pred_fallthru
            _
          %211 = vnop
        $region28: #{clamped_generalized_maxout.1} parent=23 // pred_fallthru
          _
      $region24: #{clamped_generalized_maxout.1} parent=5 // pred_fallthru
        _
      %p212 = scmp.le.s32.totalorder 1, %s12
      %p213 = scmp.lt.s32.totalorder %s12, 3
      %p214 = pnand %p212, %p213
      %p215 = pneg %p214
      // Predicated region
      $region63: #{clamped_generalized_maxout.1} parent=5 // pred_check
        _
      $region64: #{clamped_generalized_maxout.1} parent=5 // pred_check_branch
        %217 = sbr.rel (%p214) target = $region66
      $region65: #{clamped_generalized_maxout.1} parent=5 // pred_region
        %s218 = ssub.s32 %s12, 1
        %s219 = sand.u32 %s39, 1
        %s220 = sand.u32 %s39, 1
        %s221 = smul.addr %s220, 16
        %s222 = scalar_lea.vmem [#allocation2], %s221
        // Predicated region
        $region67: #{clamped_generalized_maxout.1} parent=65 // pred_check
          %p223 = pneg %p52
        $region68: #{clamped_generalized_maxout.1} parent=65 // pred_check_branch
          %225 = sbr.rel (%p223) target = $region70
        $region69: #{clamped_generalized_maxout.1} parent=65 // pred_region
          _
        $region70: #{clamped_generalized_maxout.1} parent=65 // pred_fallthru
          _
        %s226 = sand.u32 %s39, 1
        %s227 = sand.u32 %s39, 1
        %s228 = smul.addr %s227, 16
        %s229 = scalar_lea.vmem [#allocation2], %s228
        %p230 = pneg %p52
        %p231 = pneg %p49
        %p232 = scmp.lt.s32.totalorder %s21, 0
        %s233 = scalar_select %p232, %s21, 0
        %s234 = smul.addr %s233, 4
        %s235 = scalar_lea.vmem %s1, %s234
        %p236 = pneg %p78
        %p237 = pneg %p75
        %p238 = scmp.lt.s32.totalorder %s21, 0
        %s239 = scalar_select %p238, %s21, 0
        %s240 = smul.addr %s239, 4
        %s241 = scalar_lea.vmem %s2, %s240
        %p242 = pneg %p104
        %p243 = pneg %p101
        %p244 = pneg %p132
        %p245 = pneg %p129
        %s246 = sand.u32 %s119, 1
        %s247 = scalar_lea.sflag [#allocation4], %s246
        %s248 = sand.u32 %s119, 1
        %s249 = smul.addr %s248, 8
        %s250 = scalar_lea.vmem [#allocation3], %s249
        %p251 = scmp.lt.s32.totalorder %s21, 0
        %s252 = scalar_select %p251, %s21, 0
        %s253 = smul.addr %s252, 4
        %s254 = scalar_lea.vmem %s1, %s253
        %p255 = scmp.lt.s32.totalorder %s21, 0
        %s256 = scalar_select %p255, %s21, 0
        %s257 = smul.addr %s256, 4
        %s258 = scalar_lea.vmem %s2, %s257
        %v259 = vld [vmem:[%s222] sm:$0xff]
        %s260 = scalar_lea.vmem %s222, 8 [#allocation2]
        %v261 = vld [vmem:[%s260] sm:$0xff]
        %v262 = vld [vmem:[%s254] sm:$0xf]
        %v263 = vld [vmem:[%s254 + $0x4] sm:$0xf]
        %v264 = vld [vmem:[%s258] sm:$0xf]
        %v265 = vperm.slane %v262, 0
        %v266 = vmul.f32 %v259, %v265
        %v267 = vperm.slane %v263, 0
        %v268 = vmul.f32 %v261, %v267
        %v269 = vadd.f32 %v266, %v268
        %v270 = vperm.slane %v264, 0
        %v271 = vadd.f32 %v269, %v270
        %v272 = vmax.f32 %v271, 0.0
        %v273 = vperm.slane %v262, 1
        %v274 = vmul.f32 %v259, %v273
        %v275 = vperm.slane %v263, 1
        %v276 = vmul.f32 %v261, %v275
        %v277 = vadd.f32 %v274, %v276
        %v278 = vperm.slane %v264, 1
        %v279 = vadd.f32 %v277, %v278
        %v280 = vmax.f32 %v272, %v279
        %v281 = vperm.slane %v262, 2
        %v282 = vmul.f32 %v259, %v281
        %v283 = vperm.slane %v263, 2
        %v284 = vmul.f32 %v261, %v283
        %v285 = vadd.f32 %v282, %v284
        %v286 = vperm.slane %v264, 2
        %v287 = vadd.f32 %v285, %v286
        %v288 = vmax.f32 %v280, %v287
        %v289 = vperm.slane %v262, 3
        %v290 = vmul.f32 %v259, %v289
        %v291 = vperm.slane %v263, 3
        %v292 = vmul.f32 %v261, %v291
        %v293 = vadd.f32 %v290, %v292
        %v294 = vperm.slane %v264, 3
        %v295 = vadd.f32 %v293, %v294
        %v296 = vmax.f32 %v288, %v295
        %297 = vst [vmem:[%s250] sm:$0xff] %v296
        %s298 = sand.u32 %s119, 1
        %s299 = scalar_lea.sflag [#allocation4], %s298
        %s300 = sand.u32 %s119, 1
        %s301 = smul.addr %s300, 8
        %s302 = scalar_lea.vmem [#allocation3], %s301
        // Predicated region
        $region71: #{clamped_generalized_maxout.1} parent=65 // pred_check
          %p303 = pneg %p129
        $region72: #{clamped_generalized_maxout.1} parent=65 // pred_check_branch
          %305 = sbr.rel (%p303) target = $region74
        $region73: #{clamped_generalized_maxout.1} parent=65 // pred_region
          %307 = vsyncadd %s299, 0
          %s308 = sadd.s32 %s21, %s22
          %s309 = smul.addr %s308, 8
          %s310 = scalar_lea.hbm %s3, %s309
          %s312 = sshll.u32 %s302, 4
          %s313 = int_to_ptr.vmem [resolvable:$true] %s312
          %s314 = sshll.u32 %s310, 4
          %s315 = int_to_ptr.hbm [resolvable:$true] %s314
          %317 = dma.vmem_to_hbm [thread:$0]  %s313, 128, %s315, %s299
        $region74: #{clamped_generalized_maxout.1} parent=65 // pred_fallthru
          _
      $region66: #{clamped_generalized_maxout.1} parent=5 // pred_fallthru
        _
      %p318 = scmp.le.s32.totalorder 2, %s12
      // Predicated region
      $region75: #{clamped_generalized_maxout.1} parent=5 // pred_check
        %p319 = pneg %p318
      $region76: #{clamped_generalized_maxout.1} parent=5 // pred_check_branch
        %321 = sbr.rel (%p319) target = $region78
      $region77: #{clamped_generalized_maxout.1} parent=5 // pred_region
        %s322 = ssub.s32 %s12, 2
        // Predicated region
        $region79: #{clamped_generalized_maxout.1} parent=77 // pred_check
          %p323 = pneg %p135
        $region80: #{clamped_generalized_maxout.1} parent=77 // pred_check_branch
          %325 = sbr.rel (%p323) target = $region82
        $region81: #{clamped_generalized_maxout.1} parent=77 // pred_region
          %s326 = sand.u32 %s120, 1
          %s327 = scalar_lea.sflag [#allocation4], %s326
          %s328 = sand.u32 %s120, 1
          %s329 = smul.addr %s328, 8
          %s330 = scalar_lea.vmem [#allocation3], %s329
          %332 = dma.done %s327, 128
        $region82: #{clamped_generalized_maxout.1} parent=77 // pred_fallthru
          _
      $region78: #{clamped_generalized_maxout.1} parent=5 // pred_fallthru
        _
    $region6: #{clamped_generalized_maxout.1} parent=1 // loop_footer
      %s16 = sadd.s32 1, %s12
    $region7: #{clamped_generalized_maxout.1} parent=1 // loop_footer_branch
      %11 = sbr.rel target = $region3
    $region8: #{clamped_generalized_maxout.1} parent=1 // loop_exit
      _
    %333 = vsyncpa [#allocation4], 1
    %s334 = scalar_lea.sflag [#allocation4], 1
    %335 = vsyncpa %s334, 1

</llo_original>
